<compile_context>
chip_gen: v6e
topology: v6e:2x2x1
jax: 0.10.0
libtpu: 0.0.40
codegen_flags: <defaults>
</compile_context>

<pallas_src>
import math
from typing import NamedTuple, Optional

import jax
import jax.numpy as jnp
from jax.experimental import pallas as pl
from jax.experimental.pallas import tpu as pltpu


# ----------------------------------------------------------------------------
# Tiling helpers (generation aware).
# ----------------------------------------------------------------------------
def _device_vmem_bytes() -> int:
    try:
        return int(pltpu.get_tpu_info().vmem_capacity_bytes)
    except Exception:  # pragma: no cover - fall back to v5e/v6e capacity
        return 128 * 1024 * 1024


def _round8(n: int) -> int:
    return ((n + 7) // 8) * 8


def _row_tile(rows: int, cap: int) -> int:
    return cap if rows >= cap else _round8(rows)


def _contraction_tile(h: int) -> int:
    for tk in (512, 256, 128):
        if h % tk == 0:
            return tk
    return h                      # small / unaligned hidden: no K-tiling


def _vocab_tile(v: int, small_vmem: bool) -> int:
    if v % 128 != 0:
        return v                  # small / unaligned vocab: full width
    cap = 512 if small_vmem else 1024   # v7x: keep >=256 but cap VMEM pressure
    for tv in (cap, 512, 256, 128):
        if tv <= cap and v % tv == 0:
            return tv
    return 128


# ----------------------------------------------------------------------------
# Kernel 1: encoder hidden states + nugget scores
#   rows = B*S flattened, row-tiled ("parallel"); (H,H) contraction K-tiled on
#   the inner "arbitrary" axis with an f32 accumulator; tanh + score only on
#   the final K step; h written back as bf16.
# ----------------------------------------------------------------------------
def _encoder_kernel(emb_ref, w_enc_ref, w_sc_ref, h_ref, score_ref, acc_ref):
    k = pl.program_id(1)

    @pl.when(k == 0)
    def _():
        acc_ref[...] = jnp.zeros_like(acc_ref)

    acc_ref[...] += jnp.dot(emb_ref[...], w_enc_ref[...],
                            preferred_element_type=jnp.float32)

    @pl.when(k == pl.num_programs(1) - 1)
    def _():
        h = jnp.tanh(acc_ref[...])                        # (TR, H) f32 (EUP)
        h_ref[...] = h.astype(jnp.bfloat16)
        # TODO(synk): score could be written as a lane-dense (1, TR) slab to
        # use unmasked stores; kept (TR, 1) — volume is tiny.
        score_ref[...] = jnp.sum(h * w_sc_ref[...], axis=-1, keepdims=True)


# ----------------------------------------------------------------------------
# Kernel 2: decoder cross-attention (per batch) -> context vectors (bf16).
#   No (H,H) weight resident here; key-padding mask over invalid nuggets.
# ----------------------------------------------------------------------------
def _cross_attn_kernel(tgt_ref, nug_ref, msk_ref, ctx_ref):
    q = tgt_ref[0]                                        # (T, H) bf16
    n = nug_ref[0]                                        # (K, H) bf16
    scale = 1.0 / math.sqrt(q.shape[-1])
    att = jax.lax.dot_general(q, n, (((1,), (1,)), ((), ())),
                              preferred_element_type=jnp.float32) * scale
    att = att + msk_ref[0]                                # (T, K) + (1, K) mask
    att_max = jnp.max(att, axis=-1, keepdims=True)
    e = jnp.exp(att - att_max)
    p = e / jnp.sum(e, axis=-1, keepdims=True)            # f32 softmax
    ctx_ref[0] = jnp.dot(p.astype(jnp.bfloat16), n,
                         preferred_element_type=jnp.float32).astype(jnp.bfloat16)


# ----------------------------------------------------------------------------
# Kernel 3: o-proj + residual over flattened rows = B*T, (H,H) w_o K-tiled.
# ----------------------------------------------------------------------------
def _oproj_residual_kernel(ctx_ref, q_ref, w_o_ref, h_ref, acc_ref):
    k = pl.program_id(1)

    @pl.when(k == 0)
    def _():
        acc_ref[...] = jnp.zeros_like(acc_ref)

    acc_ref[...] += jnp.dot(ctx_ref[...], w_o_ref[...],
                            preferred_element_type=jnp.float32)

    @pl.when(k == pl.num_programs(1) - 1)
    def _():
        h_ref[...] = (q_ref[...].astype(jnp.float32)
                      + acc_ref[...]).astype(jnp.bfloat16)


# ----------------------------------------------------------------------------
# Kernel 4: vocab-tiled LM head + fused loss / probs over flattened rows.
#   grid = (row_tiles [parallel], vocab_tiles [arbitrary]); online logsumexp
#   + gathered label / target logits; logits written out as bf16 and never
#   re-read; vocab iota hoisted into a VMEM scratch built once per row tile.
# ----------------------------------------------------------------------------
def _lmhead_loss_kernel(h_ref, lab_ref, tid_ref, w_lm_ref,
                        logits_ref, nll_ref, probs_ref,
                        m_sc, l_sc, lab_acc, tgt_acc, iota_sc):
    v = pl.program_id(1)
    TV = w_lm_ref.shape[1]

    @pl.when(v == 0)
    def _():
        m_sc[...] = jnp.full_like(m_sc, -1e30)
        l_sc[...] = jnp.zeros_like(l_sc)
        lab_acc[...] = jnp.zeros_like(lab_acc)
        tgt_acc[...] = jnp.zeros_like(tgt_acc)
        iota_sc[...] = jax.lax.broadcasted_iota(jnp.int32, iota_sc.shape, 1)

    logits_tile = jnp.dot(h_ref[...], w_lm_ref[...],
                          preferred_element_type=jnp.float32)   # (TRD, TV) f32
    logits_ref[...] = logits_tile.astype(jnp.bfloat16)

    # Online logsumexp over the vocab tiles.
    tile_max = jnp.max(logits_tile, axis=-1, keepdims=True)
    m_new = jnp.maximum(m_sc[...], tile_max)
    l_sc[...] = (l_sc[...] * jnp.exp(m_sc[...] - m_new)
                 + jnp.sum(jnp.exp(logits_tile - m_new), axis=-1, keepdims=True))
    m_sc[...] = m_new

    # Gather label / target logits for ids that fall in this vocab tile.
    ids = iota_sc[...]
    lab_rel = lab_ref[...] - v * TV                            # (TRD, 1) int32
    tid_rel = tid_ref[...] - v * TV
    lab_acc[...] += jnp.sum(jnp.where(ids == lab_rel, logits_tile, 0.0),
                            axis=-1, keepdims=True)
    tgt_acc[...] += jnp.sum(jnp.where(ids == tid_rel, logits_tile, 0.0),
                            axis=-1, keepdims=True)

    @pl.when(v == pl.num_programs(1) - 1)
    def _():
        lse = m_sc[...] + jnp.log(l_sc[...])                   # (TRD, 1)
        valid = (lab_ref[...] >= 0).astype(jnp.float32)
        nll_ref[...] = jnp.sum((lse - lab_acc[...]) * valid, keepdims=True)
        # TODO(synk): probs stays as a last-dim-1 (masked store) slab; volume
        # is tiny (one f32 per row).
        probs_ref[...] = jnp.exp(tgt_acc[...] - lse)


class NuggetOut(NamedTuple):
    loss: jax.Array
    logits: jax.Array
    nugget_states: jax.Array
    nugget_indices: jax.Array
    nugget_scores: jax.Array
    probs: Optional[jax.Array]


def init_params(key, vocab: int, hidden: int):
    k0, k1, k2, k3, k4 = jax.random.split(key, 5)
    return dict(
        embed=0.05 * jax.random.normal(k0, (vocab, hidden), jnp.float32),
        w_enc=0.05 * jax.random.normal(k1, (hidden, hidden), jnp.float32),
        w_score=0.05 * jax.random.normal(k2, (hidden, 1), jnp.float32),
        w_o=0.05 * jax.random.normal(k3, (hidden, hidden), jnp.float32),
        w_lm=0.05 * jax.random.normal(k4, (hidden, vocab), jnp.float32),
    )


def nugget_forward(params, src_input_ids, src_attention_mask,
                   tgt_input_ids, tgt_attention_mask, objective,
                   *, ratio: float = 0.25, skip_first: int = 2,
                   return_probs: bool = True) -> NuggetOut:
    # TODO(synk): `objective`, LoRA adapters, peft wrapping, generate() and
    # state_dict filtering have no Pallas equivalent; objective is ignored.
    del objective

    small_vmem = _device_vmem_bytes() <= 64 * 1024 * 1024        # v7x
    vmem_limit = (40 if small_vmem else 64) * 1024 * 1024

    embed = params["embed"]
    w_enc_bf = params["w_enc"].astype(jnp.bfloat16)
    w_o_bf = params["w_o"].astype(jnp.bfloat16)
    w_lm_bf = params["w_lm"].astype(jnp.bfloat16)
    B, S = src_input_ids.shape
    _, T = tgt_input_ids.shape
    V, H = embed.shape
    K = max(1, int(math.ceil(ratio * S)))                        # nuggets/seq
    w_score_row = params["w_score"].reshape(1, H).astype(jnp.float32)

    # ---- glue: bf16 embedding lookup ---------------------------------------
    embed_bf = embed.astype(jnp.bfloat16)
    src_emb_bf = jnp.take(embed_bf, src_input_ids, axis=0)       # (B, S, H)
    tgt_emb_bf = jnp.take(embed_bf, tgt_input_ids, axis=0)       # (B, T, H)

    # ---- encoder + scorer (Pallas): rows flattened, K-tiled contraction ----
    TKH = _contraction_tile(H)
    n_hk = H // TKH
    rows_e = B * S
    TR = _row_tile(rows_e, 512)
    n_rt_e = pl.cdiv(rows_e, TR)
    rows_e_pad = n_rt_e * TR
    emb_flat = src_emb_bf.reshape(rows_e, H)
    if rows_e_pad != rows_e:
        emb_flat = jnp.pad(emb_flat, ((0, rows_e_pad - rows_e), (0, 0)))

    h_flat, score_flat = pl.pallas_call(
        _encoder_kernel,
        out_shape=(jax.ShapeDtypeStruct((rows_e_pad, H), jnp.bfloat16),
                   jax.ShapeDtypeStruct((rows_e_pad, 1), jnp.float32)),
        grid=(n_rt_e, n_hk),
        in_specs=[
            pl.BlockSpec((TR, TKH), lambda r, k: (r, k)),
            pl.BlockSpec((TKH, H), lambda r, k: (k, 0)),
            pl.BlockSpec((1, H), lambda r, k: (0, 0)),
        ],
        out_specs=(pl.BlockSpec((TR, H), lambda r, k: (r, 0)),
                   pl.BlockSpec((TR, 1), lambda r, k: (r, 0))),
        scratch_shapes=[pltpu.VMEM((TR, H), jnp.float32)],
        compiler_params=pltpu.CompilerParams(
            dimension_semantics=("parallel", "arbitrary"),
            vmem_limit_bytes=vmem_limit),
    )(emb_flat, w_enc_bf, w_score_row)

    h_bf = h_flat[:rows_e].reshape(B, S, H)                      # bf16
    scores = score_flat[:rows_e, 0].reshape(B, S)
    scores = jnp.where(src_attention_mask, scores, -1e30)        # mask pads

    # ---- glue: top-k nugget selection + key-padding mask over nuggets ------
    nug_scores, nug_idx = jax.lax.top_k(scores, K)               # (B, K)
    nuggets_bf = jnp.take_along_axis(h_bf, nug_idx[..., None], axis=1)  # (B,K,H)
    nug_valid = jnp.take_along_axis(src_attention_mask, nug_idx, axis=1)
    nug_mask = jnp.where(nug_valid, 0.0, -1e30).astype(jnp.float32)[:, None, :]

    # ---- labels (mask padding, skip_first), HF causal shift -----------------
    labels = jnp.where(tgt_attention_mask, tgt_input_ids, -100)
    if skip_first and T > skip_first:
        labels = labels.at[:, :skip_first].set(-100)
    lab_full = jnp.concatenate(
        [labels[:, 1:], jnp.full((B, 1), -100, labels.dtype)], axis=1)
    tid_full = jnp.concatenate(
        [tgt_input_ids[:, 1:], jnp.zeros((B, 1), tgt_input_ids.dtype)], axis=1)

    # ---- decoder cross-attention (Pallas, per batch) -------------------------
    ctx_bf = pl.pallas_call(
        _cross_attn_kernel,
        out_shape=jax.ShapeDtypeStruct((B, T, H), jnp.bfloat16),
        grid=(B,),
        in_specs=[
            pl.BlockSpec((1, T, H), lambda b: (b, 0, 0)),
            pl.BlockSpec((1, K, H), lambda b: (b, 0, 0)),
            pl.BlockSpec((1, 1, K), lambda b: (b, 0, 0)),
        ],
        out_specs=pl.BlockSpec((1, T, H), lambda b: (b, 0, 0)),
        compiler_params=pltpu.CompilerParams(
            dimension_semantics=("parallel",),
            vmem_limit_bytes=vmem_limit),
    )(tgt_emb_bf, nuggets_bf, nug_mask)

    # ---- flatten decoder rows: rows = B*T ------------------------------------
    rows_d = B * T
    TRD = _row_tile(rows_d, 256)
    n_rt_d = pl.cdiv(rows_d, TRD)
    rows_d_pad = n_rt_d * TRD
    pad_d = rows_d_pad - rows_d

    ctx_flat = ctx_bf.reshape(rows_d, H)
    q_flat = tgt_emb_bf.reshape(rows_d, H)
    lab_flat = lab_full.reshape(rows_d, 1)
    tid_flat = tid_full.reshape(rows_d, 1)
    if pad_d:
        ctx_flat = jnp.pad(ctx_flat, ((0, pad_d), (0, 0)))
        q_flat = jnp.pad(q_flat, ((0, pad_d), (0, 0)))
        lab_flat = jnp.pad(lab_flat, ((0, pad_d), (0, 0)), constant_values=-100)
        tid_flat = jnp.pad(tid_flat, ((0, pad_d), (0, 0)))

    # ---- o-proj + residual (Pallas, K-tiled (H,H) weight) --------------------
    h_dec_flat = pl.pallas_call(
        _oproj_residual_kernel,
        out_shape=jax.ShapeDtypeStruct((rows_d_pad, H), jnp.bfloat16),
        grid=(n_rt_d, n_hk),
        in_specs=[
            pl.BlockSpec((TRD, TKH), lambda r, k: (r, k)),
            pl.BlockSpec((TRD, H), lambda r, k: (r, 0)),
            pl.BlockSpec((TKH, H), lambda r, k: (k, 0)),
        ],
        out_specs=pl.BlockSpec((TRD, H), lambda r, k: (r, 0)),
        scratch_shapes=[pltpu.VMEM((TRD, H), jnp.float32)],
        compiler_params=pltpu.CompilerParams(
            dimension_semantics=("parallel", "arbitrary"),
            vmem_limit_bytes=vmem_limit),
    )(ctx_flat, q_flat, w_o_bf)

    # ---- LM head + fused loss/probs (Pallas, vocab tiled) --------------------
    TV = _vocab_tile(V, small_vmem)
    n_v = V // TV
    logits_flat, nll_per_tile, probs_flat = pl.pallas_call(
        _lmhead_loss_kernel,
        out_shape=(jax.ShapeDtypeStruct((rows_d_pad, V), jnp.bfloat16),
                   jax.ShapeDtypeStruct((n_rt_d, 1), jnp.float32),
                   jax.ShapeDtypeStruct((rows_d_pad, 1), jnp.float32)),
        grid=(n_rt_d, n_v),
        in_specs=[
            pl.BlockSpec((TRD, H), lambda r, v: (r, 0)),
            pl.BlockSpec((TRD, 1), lambda r, v: (r, 0)),
            pl.BlockSpec((TRD, 1), lambda r, v: (r, 0)),
            pl.BlockSpec((H, TV), lambda r, v: (0, v)),
        ],
        out_specs=(pl.BlockSpec((TRD, TV), lambda r, v: (r, v)),
                   pl.BlockSpec((1, 1), lambda r, v: (r, 0)),
                   pl.BlockSpec((TRD, 1), lambda r, v: (r, 0))),
        scratch_shapes=[
            pltpu.VMEM((TRD, 1), jnp.float32),    # running max
            pltpu.VMEM((TRD, 1), jnp.float32),    # running sum-exp
            pltpu.VMEM((TRD, 1), jnp.float32),    # gathered label logit
            pltpu.VMEM((TRD, 1), jnp.float32),    # gathered target logit
            pltpu.VMEM((TRD, TV), jnp.int32),     # hoisted vocab-tile iota
        ],
        compiler_params=pltpu.CompilerParams(
            dimension_semantics=("parallel", "arbitrary"),
            vmem_limit_bytes=vmem_limit),
    )(h_dec_flat, lab_flat, tid_flat, w_lm_bf)

    # ---- glue: reshape / final scalar reduction ------------------------------
    logits = logits_flat[:rows_d].reshape(B, T, V)               # bf16
    cnt = jnp.sum((labels[:, 1:] >= 0).astype(jnp.float32))
    loss = jnp.sum(nll_per_tile) / jnp.maximum(cnt, 1.0)
    probs = (probs_flat[:rows_d, 0].reshape(B, T)[:, :T - 1]
             if return_probs else None)

    return NuggetOut(loss, logits, nuggets_bf, nug_idx, nug_scores, probs)


if __name__ == "__main__":
    B, S, T, H, V = 2, 16, 8, 32, 64

    key = jax.random.PRNGKey(0)
    kp, k1, k2 = jax.random.split(key, 3)
    params = init_params(kp, vocab=V, hidden=H)

    src_input_ids = jax.random.randint(k1, (B, S), 0, V, dtype=jnp.int32)
    tgt_input_ids = jax.random.randint(k2, (B, T), 0, V, dtype=jnp.int32)
    src_attention_mask = jnp.ones((B, S), dtype=bool).at[1, S - 3:].set(False)
    tgt_attention_mask = jnp.ones((B, T), dtype=bool).at[1, T - 2:].set(False)
    objective = jnp.zeros((B,), dtype=jnp.int32)

    out = nugget_forward(params, src_input_ids, src_attention_mask,
                         tgt_input_ids, tgt_attention_mask, objective,
                         ratio=0.25, skip_first=2, return_probs=True)

    jax.block_until_ready((out.loss, out.logits, out.probs))
    assert out.logits.shape == (B, T, V)
    assert out.probs.shape == (B, T - 1)
    assert out.nugget_states.shape == (B, 4, H)
    assert bool(jnp.isfinite(out.loss))
    assert bool(jnp.all(jnp.isfinite(out.probs)))
    print("KERNEL_OK")
</pallas_src>

<mosaic_0001>
module attributes {stable_mosaic.version = 11 : i64} {
  func.func @_encoder_kernel(%arg0: i32, %arg1: i32, %arg2: memref<32x32xbf16, #tpu.memory_space<vmem>>, %arg3: memref<32x32xbf16, #tpu.memory_space<vmem>>, %arg4: memref<1x32xf32, #tpu.memory_space<vmem>>, %arg5: memref<32x32xbf16, #tpu.memory_space<vmem>>, %arg6: memref<32x1xf32, #tpu.memory_space<vmem>>, %arg7: memref<32x32xf32, #tpu.memory_space<vmem>>) attributes {dimension_semantics = [#tpu.dimension_semantics<parallel>, #tpu.dimension_semantics<arbitrary>], iteration_bounds = array<i64: 1, 1>, scalar_prefetch = 0 : i64, scratch_operands = 1 : i64, tpu.core_type = #tpu.core_type<tc>, window_params = [{transform_indices = @transform_0, window_bounds = array<i64: 32, 32>}, {transform_indices = @transform_1, window_bounds = array<i64: 32, 32>}, {pipeline_mode = #tpu.pipeline_mode<synchronous>, transform_indices = @transform_2, window_bounds = array<i64: 1, 32>}, {transform_indices = @transform_3, window_bounds = array<i64: 32, 32>}, {transform_indices = @transform_4, window_bounds = array<i64: 32, 1>}]} {
    %c0_i32 = arith.constant 0 : i32
    %0 = arith.cmpi eq, %arg1, %c0_i32 : i32
    %1 = arith.extui %0 : i1 to i32
    %c0_i32_0 = arith.constant 0 : i32
    %2 = arith.cmpi ne, %1, %c0_i32_0 : i32
    scf.if %2 {
      %cst_10 = arith.constant 0.000000e+00 : f32
      %12 = vector.broadcast %cst_10 : f32 to vector<32x32xf32>
      %c0_11 = arith.constant 0 : index
      %c0_12 = arith.constant 0 : index
      %13 = vector.load %arg7[%c0_11, %c0_12] : memref<32x32xf32, #tpu.memory_space<vmem>>, vector<32x32xf32>
      tpu.vector_store %arg7[%c0_11, %c0_12], %12 {strides = array<i32>} : memref<32x32xf32, #tpu.memory_space<vmem>>, vector<32x32xf32>,
    } else {
    }
    %c0 = arith.constant 0 : index
    %c0_1 = arith.constant 0 : index
    %3 = vector.load %arg7[%c0, %c0_1] : memref<32x32xf32, #tpu.memory_space<vmem>>, vector<32x32xf32>
    %c0_2 = arith.constant 0 : index
    %c0_3 = arith.constant 0 : index
    %4 = vector.load %arg2[%c0_2, %c0_3] : memref<32x32xbf16, #tpu.memory_space<vmem>>, vector<32x32xbf16>
    %c0_4 = arith.constant 0 : index
    %c0_5 = arith.constant 0 : index
    %5 = vector.load %arg3[%c0_4, %c0_5] : memref<32x32xbf16, #tpu.memory_space<vmem>>, vector<32x32xbf16>
    %cst = arith.constant dense<0.000000e+00> : vector<32x32xf32>
    %6 = tpu.matmul %4, %5, %cst {dimension_numbers = #tpu.dot_dimension_numbers<[1], [0], [0], [1], [0, 0, 1, 1], [], []>} : vector<32x32xbf16>, vector<32x32xbf16>, vector<32x32xf32> -> vector<32x32xf32>
    %7 = arith.addf %3, %6 : vector<32x32xf32>
    %c0_6 = arith.constant 0 : index
    %c0_7 = arith.constant 0 : index
    %8 = vector.load %arg7[%c0_6, %c0_7] : memref<32x32xf32, #tpu.memory_space<vmem>>, vector<32x32xf32>
    tpu.vector_store %arg7[%c0_6, %c0_7], %7 {strides = array<i32>} : memref<32x32xf32, #tpu.memory_space<vmem>>, vector<32x32xf32>,
    %c0_i32_8 = arith.constant 0 : i32
    %9 = arith.cmpi eq, %arg1, %c0_i32_8 : i32
    %10 = arith.extui %9 : i1 to i32
    %c0_i32_9 = arith.constant 0 : i32
    %11 = arith.cmpi ne, %10, %c0_i32_9 : i32
    scf.if %11 {
      %c0_10 = arith.constant 0 : index
      %c0_11 = arith.constant 0 : index
      %12 = vector.load %arg7[%c0_10, %c0_11] : memref<32x32xf32, #tpu.memory_space<vmem>>, vector<32x32xf32>
      %13 = math.tanh %12 : vector<32x32xf32>
      %14 = arith.truncf %13 : vector<32x32xf32> to vector<32x32xbf16>
      %c0_12 = arith.constant 0 : index
      %c0_13 = arith.constant 0 : index
      %15 = vector.load %arg5[%c0_12, %c0_13] : memref<32x32xbf16, #tpu.memory_space<vmem>>, vector<32x32xbf16>
      tpu.vector_store %arg5[%c0_12, %c0_13], %14 {strides = array<i32>} : memref<32x32xbf16, #tpu.memory_space<vmem>>, vector<32x32xbf16>,
      %c0_14 = arith.constant 0 : index
      %c0_15 = arith.constant 0 : index
      %16 = vector.load %arg4[%c0_14, %c0_15] : memref<1x32xf32, #tpu.memory_space<vmem>>, vector<1x32xf32>
      %17 = vector.broadcast %16 : vector<1x32xf32> to vector<32x32xf32>
      %18 = arith.mulf %13, %17 : vector<32x32xf32>
      %cst_16 = arith.constant dense<0.000000e+00> : vector<32xf32>
      %19 = vector.multi_reduction <add>, %18, %cst_16 [1] : vector<32x32xf32> to vector<32xf32>
      %20 = vector.shape_cast %19 : vector<32xf32> to vector<32x1xf32>
      %c0_17 = arith.constant 0 : index
      %c0_18 = arith.constant 0 : index
      %21 = vector.load %arg6[%c0_17, %c0_18] : memref<32x1xf32, #tpu.memory_space<vmem>>, vector<32x1xf32>
      tpu.vector_store %arg6[%c0_17, %c0_18], %20 {strides = array<i32>} : memref<32x1xf32, #tpu.memory_space<vmem>>, vector<32x1xf32>,
    } else {
    }
    return
  }
  func.func @transform_0(%arg0: i32, %arg1: i32) -> (i32, i32) {
    %c0_i32 = arith.constant 0 : i32
    return %arg0, %arg1 : i32, i32
  }
  func.func @transform_1(%arg0: i32, %arg1: i32) -> (i32, i32) {
    %c0_i32 = arith.constant 0 : i32
    %c0_i32_0 = arith.constant 0 : i32
    return %arg1, %c0_i32 : i32, i32
  }
  func.func @transform_2(%arg0: i32, %arg1: i32) -> (i32, i32) {
    %c0_i32 = arith.constant 0 : i32
    %c0_i32_0 = arith.constant 0 : i32
    %c0_i32_1 = arith.constant 0 : i32
    return %c0_i32, %c0_i32_0 : i32, i32
  }
  func.func @transform_3(%arg0: i32, %arg1: i32) -> (i32, i32) {
    %c0_i32 = arith.constant 0 : i32
    %c0_i32_0 = arith.constant 0 : i32
    return %arg0, %c0_i32 : i32, i32
  }
  func.func @transform_4(%arg0: i32, %arg1: i32) -> (i32, i32) {
    %c0_i32 = arith.constant 0 : i32
    %c0_i32_0 = arith.constant 0 : i32
    return %arg0, %c0_i32 : i32, i32
  }
}

</mosaic_0001>

<llo_original>
// kernel: tpu_custom_call.1
$region0: #{tpu_custom_call.1}
  #allocation0 [shape = 'u32[]', space=smem, size = 0x4, offset = 0x4, fixed_abs, tag = 'smem constant byte address 0x4 - core index']
  #allocation1 [shape = 'u32[144,128]{1,0:T(1,128)}', space=vmem, size = 0x12000, scoped, tag = 'internal scratch']
  #allocation2 [shape = 'f32[32,32]{1,0:T(8,128)}', space=vmem, size = 0x4000, scoped, tag = 'scratch operand']
  %s0 = inlined_call_operand.hbm [shape: bf16[32,32], index: 0, kind: input, shape index: {}]
  %s1 = inlined_call_operand.hbm [shape: bf16[32,32], index: 1, kind: input, shape index: {}]
  %s2 = inlined_call_operand.vmem [shape: f32[1,32], index: 2, kind: input, shape index: {}]
  %s3 = inlined_call_operand.hbm [shape: bf16[32,32], index: 3, kind: output, shape index: {0}]
  %s4 = inlined_call_operand.vmem [shape: f32[32,1], index: 4, kind: output, shape index: {1}]
  %5 = xla_tuple %s3, %s4
  %s6 = sld [smem:[#allocation0]]
  $region46: #{tpu_custom_call.1} parent=0
    _
  %s8 = ssub.s32 1, %s6
  %s9 = scalar_select 0, %s8, %s6
  $region1: #{tpu_custom_call.1} parent=0
    #allocation3 [shape = 'u8[8192]{0}', space=vmem, size = 0x2000, scoped, tag = 'input window, operand 0, single buffered']
    #allocation4 [shape = 's32[1]{0}', space=sflag, size = 0x4, scoped, tag = 'scoped memory for tpu_custom_call.1']
    #allocation5 [shape = 's32[1]{0}', space=sflag, size = 0x4, scoped, tag = 'scoped memory for tpu_custom_call.1']
    #allocation6 [shape = 'u8[8192]{0}', space=vmem, size = 0x2000, scoped, tag = 'input window, operand 1, single buffered']
    #allocation7 [shape = 's32[1]{0}', space=sflag, size = 0x4, scoped, tag = 'scoped memory for tpu_custom_call.1']
    #allocation8 [shape = 'u8[8192]{0}', space=vmem, size = 0x2000, scoped, tag = 'output window, operand 0, single buffered']
    %10 = vsyncpa [#allocation4], 0
    %11 = vsyncpa [#allocation7], 0
    %12 = vsyncpa [#allocation5], 0
    // Predicated region
    $region2: #{tpu_custom_call.1} parent=1 // pred_check
      _
    $region3: #{tpu_custom_call.1} parent=1 // pred_check_branch
      %14 = sbr.rel (0) target = $region5
    $region4: #{tpu_custom_call.1} parent=1 // pred_region
      %s16 = ssub.s32 256, 256
      %17 = vsyncadd [#allocation4], %s16
      %s18 = sshll.u32 [#allocation3], 4
      %s19 = int_to_ptr.vmem [resolvable:$true] %s18
      %24 = dma.hbm_to_vmem [thread:$0]  %s0, 256, %s19, [#allocation4], 64, 64, 4
    $region5: #{tpu_custom_call.1} parent=1 // pred_fallthru
      _
    // Predicated region
    $region6: #{tpu_custom_call.1} parent=1 // pred_check
      _
    $region7: #{tpu_custom_call.1} parent=1 // pred_check_branch
      %26 = sbr.rel (0) target = $region9
    $region8: #{tpu_custom_call.1} parent=1 // pred_region
      %s28 = ssub.s32 256, 256
      %29 = vsyncadd [#allocation7], %s28
      %s30 = sshll.u32 [#allocation6], 4
      %s31 = int_to_ptr.vmem [resolvable:$true] %s30
      %36 = dma.hbm_to_vmem [thread:$0]  %s1, 256, %s31, [#allocation7], 64, 64, 4
    $region9: #{tpu_custom_call.1} parent=1 // pred_fallthru
      _
    // Predicated region
    $region10: #{tpu_custom_call.1} parent=1 // pred_check
      _
    $region11: #{tpu_custom_call.1} parent=1 // pred_check_branch
      %38 = sbr.rel (0) target = $region13
    $region12: #{tpu_custom_call.1} parent=1 // pred_region
      _
    $region13: #{tpu_custom_call.1} parent=1 // pred_fallthru
      _
    // Predicated region
    $region14: #{tpu_custom_call.1} parent=1 // pred_check
      _
    $region15: #{tpu_custom_call.1} parent=1 // pred_check_branch
      %40 = sbr.rel (0) target = $region17
    $region16: #{tpu_custom_call.1} parent=1 // pred_region
      %41 = dma.done [#allocation4], 256
    $region17: #{tpu_custom_call.1} parent=1 // pred_fallthru
      _
    // Predicated region
    $region18: #{tpu_custom_call.1} parent=1 // pred_check
      _
    $region19: #{tpu_custom_call.1} parent=1 // pred_check_branch
      %43 = sbr.rel (0) target = $region21
    $region20: #{tpu_custom_call.1} parent=1 // pred_region
      %44 = dma.done [#allocation7], 256
    $region21: #{tpu_custom_call.1} parent=1 // pred_fallthru
      _
    %p46 = scmp.eq.s32.totalorder 0, 0
    // Predicated region
    $region22: #{tpu_custom_call.1} parent=1 // pred_check
      %p47 = pneg %p46
    $region23: #{tpu_custom_call.1} parent=1 // pred_check_branch
      %49 = sbr.rel (%p47) target = $region25
    $region24: #{tpu_custom_call.1} parent=1 // pred_region
      %vm50 = vcmask 261120
      %51 = vst.msk [vmem:[#allocation2] sm:$0xff] %vm50, 0.0
      %52 = vst.msk [vmem:[#allocation2 + $0x8] sm:$0xff] %vm50, 0.0
      %53 = vst.msk [vmem:[#allocation2 + $0x10] sm:$0xff] %vm50, 0.0
      %54 = vst.msk [vmem:[#allocation2 + $0x18] sm:$0xff] %vm50, 0.0
    $region25: #{tpu_custom_call.1} parent=1 // pred_fallthru
      _
    %v55 = vld [vmem:[#allocation2] sm:$0xff]
    %v56 = vld [vmem:[#allocation2 + $0x8] sm:$0xff]
    %v57 = vld [vmem:[#allocation2 + $0x10] sm:$0xff]
    %v58 = vld [vmem:[#allocation2 + $0x18] sm:$0xff]
    %v59 = vld [vmem:[#allocation3] sm:$0xf]
    %v60 = vld [vmem:[#allocation3 + $0x4] sm:$0xf]
    %v61 = vld [vmem:[#allocation3 + $0x8] sm:$0xf]
    %v62 = vld [vmem:[#allocation3 + $0xc] sm:$0xf]
    %v63 = vld [vmem:[#allocation6] sm:$0xf]
    %v64 = vld [vmem:[#allocation6 + $0x4] sm:$0xf]
    %v65 = vld [vmem:[#allocation6 + $0x8] sm:$0xf]
    %v66 = vld [vmem:[#allocation6 + $0xc] sm:$0xf]
    %v71 = vunpack.c.l.b16 %v59
    %v72 = vunpack.c.l.b16 %v60
    %v73 = vunpack.c.l.b16 %v61
    %v74 = vunpack.c.l.b16 %v62
    %v75 = vpack.c.b16 %v72, %v71
    %v76 = vpack.c.b16 %v74, %v73
    %v81 = vunpack.c.l.b16 %v63
    %v82 = vunpack.c.l.b16 %v64
    %v83 = vunpack.c.l.b16 %v65
    %v84 = vunpack.c.l.b16 %v66
    %v85 = vpack.c.b16 %v82, %v81
    %v86 = vpack.c.b16 %v84, %v83
    %vm89 = vcmask 261120
    %v91 = vsel %vm89, %v75, 0
    %v94 = vsel %vm89, %v76, 0
    %96 = vmatprep.subr.bf16.mxu0 0
    %97 = vmatpush1.bf16.msra.mxu0 0
    %98 = vmatprep.subr.bf16.mxu0 0
    %99 = vmatpush1.bf16.msra.mxu0 0
    %100 = vmatprep.subr.bf16.mxu0 0
    %101 = vmatpush1.bf16.msra.mxu0 0
    %102 = vmatprep.subr.bf16.mxu0 0
    %103 = vmatpush1.bf16.msra.mxu0 0
    %104 = vmatprep.subr.bf16.mxu0 0
    %105 = vmatpush1.bf16.msra.mxu0 0
    %106 = vmatprep.subr.bf16.mxu0 0
    %107 = vmatpush1.bf16.msra.mxu0 0
    %108 = vmatprep.subr.bf16.mxu0 0
    %109 = vmatpush1.bf16.msra.mxu0 %v86
    %110 = vmatprep.subr.bf16.mxu0 0
    %111 = vmatpush1.bf16.msra.mxu0 %v85
    %112 = vmatprep.subr.bf16.mxu0 0
    %113 = vmatpush2.bf16.msra.mxu0 0
    %114 = vmatprep.subr.bf16.mxu0 0
    %115 = vmatpush2.bf16.msra.mxu0 0
    %116 = vmatprep.subr.bf16.mxu0 0
    %117 = vmatpush2.bf16.msra.mxu0 0
    %118 = vmatprep.subr.bf16.mxu0 0
    %119 = vmatpush2.bf16.msra.mxu0 0
    %120 = vmatprep.subr.bf16.mxu0 0
    %121 = vmatpush2.bf16.msra.mxu0 0
    %122 = vmatprep.subr.bf16.mxu0 0
    %123 = vmatpush2.bf16.msra.mxu0 0
    %124 = vmatprep.subr.bf16.mxu0 0
    %125 = vmatpush2.bf16.msra.mxu0 0
    %126 = vmatprep.subr.bf16.mxu0 0
    %127 = vmatpush2.bf16.msra.mxu0 0
    %128 = vmatprep.mubr.bf16.mxu0 0
    %129 = vmatmul.mubr.bf16.gmra.mxu0 %v91
    %v130 = vpop.f32.mrf.mxu0
    %v131 = vadd.f32 0.0, %v130
    %v132 = vpop.f32.mrf.mxu0
    %v133 = vpop.f32.mrf.mxu0
    %v134 = vadd.f32 0.0, %v133
    %v135 = vpop.f32.mrf.mxu0
    %136 = vmatprep.mubr.bf16.mxu0 0
    %137 = vmatmul.mubr.bf16.gmra.mxu0 %v94
    %v138 = vpop.f32.mrf.mxu0
    %v139 = vadd.f32 0.0, %v138
    %v140 = vpop.f32.mrf.mxu0
    %v141 = vpop.f32.mrf.mxu0
    %v142 = vadd.f32 0.0, %v141
    %v143 = vpop.f32.mrf.mxu0
    %144 = vdwg.mxu0
    %v145 = vadd.f32 %v55, %v131
    %v146 = vadd.f32 %v56, %v134
    %v147 = vadd.f32 %v57, %v139
    %v148 = vadd.f32 %v58, %v142
    %149 = vst.msk [vmem:[#allocation2] sm:$0xff] %vm89, %v145
    %150 = vst.msk [vmem:[#allocation2 + $0x8] sm:$0xff] %vm89, %v146
    %151 = vst.msk [vmem:[#allocation2 + $0x10] sm:$0xff] %vm89, %v147
    %152 = vst.msk [vmem:[#allocation2 + $0x18] sm:$0xff] %vm89, %v148
    // Predicated region
    $region26: #{tpu_custom_call.1} parent=1 // pred_check
      %p153 = pneg %p46
    $region27: #{tpu_custom_call.1} parent=1 // pred_check_branch
      %155 = sbr.rel (%p153) target = $region29
    $region28: #{tpu_custom_call.1} parent=1 // pred_region
      %v156 = vld [vmem:[#allocation2] sm:$0xff]
      %v157 = vld [vmem:[#allocation2 + $0x8] sm:$0xff]
      %v158 = vld [vmem:[#allocation2 + $0x10] sm:$0xff]
      %v159 = vld [vmem:[#allocation2 + $0x18] sm:$0xff]
      %v160 = vtanh.pop %v156
      %v161 = vtanh.pop %v157
      %v162 = vtanh.pop %v158
      %v163 = vtanh.pop %v159
      %v164 = vpack.c.bf16 %v161, %v160
      %v165 = vpack.c.bf16 %v163, %v162
      %v168 = vunpack.c.l.b16 %v164
      %v169 = vunpack.c.h.b16 %v164
      %v170 = vunpack.c.l.b16 %v165
      %v171 = vunpack.c.h.b16 %v165
      %v172 = vpack.c.b16 %v168, %v168
      %v173 = vpack.c.b16 %v169, %v169
      %v174 = vpack.c.b16 %v170, %v170
      %v175 = vpack.c.b16 %v171, %v171
      %vm180 = vcmask 257024
      %181 = vst.msk [vmem:[#allocation8] sm:$0xf] %vm180, %v172
      %182 = vst.msk [vmem:[#allocation8 + $0x4] sm:$0xf] %vm180, %v173
      %183 = vst.msk [vmem:[#allocation8 + $0x8] sm:$0xf] %vm180, %v174
      %184 = vst.msk [vmem:[#allocation8 + $0xc] sm:$0xf] %vm180, %v175
      %v185 = vld [vmem:[%s2] sm:$0x1]
      %v187 = vlaneseq
      %v188 = vshrl.u32 %v187, 7
      %v189 = vsub.s32 0, %v188
      %v190 = vrot.slane %v185, %v189
      %v192 = vmul.f32 %v160, %v190
      %v193 = vmul.f32 %v161, %v190
      %v194 = vmul.f32 %v162, %v190
      %v195 = vmul.f32 %v163, %v190
      %v196 = vsel %vm89, %v192, 0.0
      %197 = vadd.xlane.f32.xlu0 %v196
      %v198 = vpop.xlane.xlu0 %197
      %v199 = vsel %vm89, %v193, 0.0
      %200 = vadd.xlane.f32.xlu0 %v199
      %v201 = vpop.xlane.xlu0 %200
      %v202 = vsel %vm89, %v194, 0.0
      %203 = vadd.xlane.f32.xlu0 %v202
      %v204 = vpop.xlane.xlu0 %203
      %v205 = vsel %vm89, %v195, 0.0
      %206 = vadd.xlane.f32.xlu0 %v205
      %v207 = vpop.xlane.xlu0 %206
      %vm208 = vcmask 7168
      %209 = vst.msk [vmem:[%s4] sm:$0xff] %vm208, %v198
      %210 = vst.msk [vmem:[%s4 + $0x8] sm:$0xff] %vm208, %v201
      %211 = vst.msk [vmem:[%s4 + $0x10] sm:$0xff] %vm208, %v204
      %212 = vst.msk [vmem:[%s4 + $0x18] sm:$0xff] %vm208, %v207
    $region29: #{tpu_custom_call.1} parent=1 // pred_fallthru
      _
    // Predicated region
    $region30: #{tpu_custom_call.1} parent=1 // pred_check
      _
    $region31: #{tpu_custom_call.1} parent=1 // pred_check_branch
      %214 = sbr.rel (0) target = $region33
    $region32: #{tpu_custom_call.1} parent=1 // pred_region
      %s216 = ssub.s32 256, 256
      %217 = vsyncadd [#allocation5], %s216
      %s218 = sshll.u32 [#allocation8], 4
      %s219 = int_to_ptr.vmem [resolvable:$true] %s218
      %224 = dma.vmem_to_hbm [thread:$0]  %s219, 256, %s3, [#allocation5], 64, 64, 4
    $region33: #{tpu_custom_call.1} parent=1 // pred_fallthru
      _
    // Predicated region
    $region34: #{tpu_custom_call.1} parent=1 // pred_check
      _
    $region35: #{tpu_custom_call.1} parent=1 // pred_check_branch
      %226 = sbr.rel (0) target = $region37
    $region36: #{tpu_custom_call.1} parent=1 // pred_region
      _
    $region37: #{tpu_custom_call.1} parent=1 // pred_fallthru
      _
    // Predicated region
    $region38: #{tpu_custom_call.1} parent=1 // pred_check
      _
    $region39: #{tpu_custom_call.1} parent=1 // pred_check_branch
      %228 = sbr.rel (0) target = $region41
    $region40: #{tpu_custom_call.1} parent=1 // pred_region
      %229 = dma.done [#allocation5], 256
    $region41: #{tpu_custom_call.1} parent=1 // pred_fallthru
      _
    // Predicated region
    $region42: #{tpu_custom_call.1} parent=1 // pred_check
      _
    $region43: #{tpu_custom_call.1} parent=1 // pred_check_branch
      %231 = sbr.rel (0) target = $region45
    $region44: #{tpu_custom_call.1} parent=1 // pred_region
      _
    $region45: #{tpu_custom_call.1} parent=1 // pred_fallthru
      _
    %232 = vsyncpa [#allocation4], 1
    %233 = vsyncpa [#allocation7], 1
    %234 = vsyncpa [#allocation5], 1

</llo_original>
